<compile_context>
chip_gen: v7x
topology: tpu7x:2x2x1
jax: 0.10.0
libtpu: 0.0.40
codegen_flags: <defaults>
</compile_context>

<pallas_src>
import functools

import jax
import jax.numpy as jnp
from jax import lax
from jax.experimental import pallas as pl
from jax.experimental.pallas import tpu as pltpu

_LANE = 128  # lane width: last dims padded to a multiple of this


def _round_up(n, m):
    return ((n + m - 1) // m) * m


def _preferred_query_tile():
    """128 on v7x (64 MiB VMEM); 256 on 128 MiB-VMEM parts (v5e / v6e)."""
    try:
        kind = jax.devices()[0].device_kind.lower()
    except Exception:
        return 128
    if "v7" in kind:
        return 128
    if "v5" in kind or "v6" in kind:
        return 256
    return 128


def _vmem_limit_bytes(tq, sp, dp, out_itemsize):
    """Generous scoped-VMEM estimate: double-buffered blocks + f32 temps."""
    in_bytes = 2 * (tq * dp * 2 + dp * dp * 2 + 8 * dp * 4 + dp * sp * 2)
    out_bytes = 2 * tq * sp * out_itemsize
    tmp_bytes = 4 * tq * sp * 4 + 2 * tq * dp * 4
    total = in_bytes + out_bytes + tmp_bytes + (1 << 20)
    return int(min(max(total, 8 << 20), 32 << 20))


# --------------------------------- kernels --------------------------------- #

def _project_kt_kernel(x_ref, wkt_ref, bk_ref, kt_ref):
    """One-shot K projection: kt = (x @ Wk^T + bk)^T stored as bf16 (Dp, Sp).

    Runs once per forward call (not once per query tile), so the single
    in-kernel transpose here removes any per-tile XLU / re-projection work
    from the attention hot loop.
    """
    k = jnp.dot(x_ref[...], wkt_ref[...],
                preferred_element_type=jnp.float32) + bk_ref[...]
    kt_ref[...] = k.T.astype(kt_ref.dtype)


def _vit_attn_kernel(x_ref, wqt_ref, bq_ref, kt_ref, out_ref, *,
                     n_keys, approx_recip):
    """Per-query-tile: Q projection + Q @ K^T + masked f32 softmax.

    x_ref   : (TQ, Dp) bf16   query-row tile for this grid step (pipelined)
    wqt_ref : (Dp, Dp) bf16   Wq^T with 1/sqrt(dim) folded in (resident)
    bq_ref  : (1, Dp)  f32    bq with 1/sqrt(dim) folded in (resident)
    kt_ref  : (Dp, Sp) bf16   precomputed K^T (resident)
    out_ref : (TQ, Sp)        softmax(Q K^T / sqrt(dim)) rows
    """
    # Q projection (MXU, bf16 in / f32 acc); scale already folded into Wq^T/bq.
    q = jnp.dot(x_ref[...], wqt_ref[...],
                preferred_element_type=jnp.float32) + bq_ref[...]

    # Scores: plain (TQ, Dp) x (Dp, Sp) contraction -- no in-kernel transpose.
    scores = jnp.dot(q.astype(jnp.bfloat16), kt_ref[...],
                     preferred_element_type=jnp.float32)          # (TQ, Sp) f32

    # Mask padded key columns so the softmax matches the unpadded problem.
    sp = scores.shape[-1]
    if n_keys < sp:
        col = lax.broadcasted_iota(jnp.int32, scores.shape, 1)
        scores = jnp.where(col < n_keys, scores, -1e30)

    # Softmax strictly in f32 (VPU max/sum, EUP exp).
    m = jnp.max(scores, axis=-1, keepdims=True)
    e = jnp.exp(scores - m)
    denom = jnp.sum(e, axis=-1, keepdims=True)
    if approx_recip:
        # EUP fast path: rows then sum to 1 only to ~1e-3.
        probs = e * pl.reciprocal(denom, approx=True)
    else:
        probs = e / denom  # exact normalization (default)
    out_ref[...] = probs.astype(out_ref.dtype)


# --------------------------------- wrappers -------------------------------- #

def prepare_params(wq, bq, wk, bk):
    """Pad / transpose / scale-fold the nn.Linear params ONCE (cache result).

    PyTorch nn.Linear weights are (out, in); we store (in, out) zero-padded to
    lane-dense (Dp, Dp) bf16 so the kernels never transpose a weight, and fold
    1/sqrt(dim) into Wq^T and bq.
    Returns (wqt, bqp, wkt, bkp).
    """
    dim = wq.shape[0]
    dp = _round_up(dim, _LANE)
    scale = 1.0 / (float(dim) ** 0.5)

    wqt = jnp.zeros((dp, dp), jnp.bfloat16).at[:dim, :dim].set(
        (wq.T.astype(jnp.float32) * scale).astype(jnp.bfloat16))
    bqp = jnp.zeros((1, dp), jnp.float32).at[:, :dim].set(
        bq.reshape(1, -1).astype(jnp.float32) * scale)
    wkt = jnp.zeros((dp, dp), jnp.bfloat16).at[:dim, :dim].set(
        wk.T.astype(jnp.bfloat16))
    bkp = jnp.zeros((1, dp), jnp.float32).at[:, :dim].set(
        bk.reshape(1, -1).astype(jnp.float32))
    return wqt, bqp, wkt, bkp


def simple_vit_attention_prepared(x, wqt, bqp, wkt, bkp, *,
                                  out_dtype=jnp.float32, approx_recip=False):
    """SimpleViT forward with pre-prepared (padded / transposed / scaled) params.

    x: (S, D) f32.  Returns softmax(Q K^T / sqrt(D)) of shape (S, S).
    """
    s, d = x.shape
    dp = wqt.shape[0]
    tq = min(_preferred_query_tile(), _round_up(max(s, 1), _LANE))
    sp = _round_up(s, tq)

    xp = jnp.zeros((sp, dp), jnp.bfloat16).at[:s, :d].set(x.astype(jnp.bfloat16))

    # K^T computed once per call (one-shot kernel, whole operands in VMEM).
    kt = pl.pallas_call(
        _project_kt_kernel,
        out_shape=jax.ShapeDtypeStruct((dp, sp), jnp.bfloat16),
    )(xp, wkt, bkp)

    kernel = functools.partial(_vit_attn_kernel, n_keys=s,
                               approx_recip=approx_recip)
    vmem_limit = _vmem_limit_bytes(tq, sp, dp, jnp.dtype(out_dtype).itemsize)

    out = pl.pallas_call(
        kernel,
        out_shape=jax.ShapeDtypeStruct((sp, sp), out_dtype),
        grid_spec=pltpu.PrefetchScalarGridSpec(
            num_scalar_prefetch=0,
            grid=(sp // tq,),
            in_specs=[
                pl.BlockSpec((tq, dp), lambda i: (i, 0)),   # query-row tile
                pl.BlockSpec((dp, dp), lambda i: (0, 0)),   # Wq^T (resident)
                pl.BlockSpec((1, dp), lambda i: (0, 0)),    # bq (resident)
                pl.BlockSpec((dp, sp), lambda i: (0, 0)),   # K^T (resident)
            ],
            out_specs=pl.BlockSpec((tq, sp), lambda i: (i, 0)),
        ),
        compiler_params=pltpu.CompilerParams(
            dimension_semantics=("parallel",),   # query tiles -> both v7x TCs
            vmem_limit_bytes=vmem_limit,
        ),
    )(xp, wqt, bqp, kt)

    # NOTE: at large S the consumer should index the padded (Sp, Sp) buffer
    # lazily instead of paying this extra HBM round-trip; kept here so the
    # public API returns exactly (S, S) like the PyTorch module.
    return out[:s, :s]


def simple_vit_attention(x, wq, bq, wk, bk, **kwargs):
    """Convenience wrapper: prepare params on the fly (prefer caching them)."""
    wqt, bqp, wkt, bkp = prepare_params(wq, bq, wk, bk)
    return simple_vit_attention_prepared(x, wqt, bqp, wkt, bkp, **kwargs)


def _reference(x, wq, bq, wk, bk):
    d = x.shape[-1]
    q = x @ wq.T + bq.reshape(1, -1)
    k = x @ wk.T + bk.reshape(1, -1)
    scores = (q @ k.T) / (d ** 0.5)
    return jax.nn.softmax(scores, axis=-1)


if __name__ == "__main__":
    dim = 16  # SimpleViT(dim=16)

    key = jax.random.PRNGKey(0)
    k_x, k_wq, k_bq, k_wk, k_bk = jax.random.split(key, 5)

    # nn.Linear-style init: U(-1/sqrt(in), 1/sqrt(in)).
    bound = 1.0 / (dim ** 0.5)
    wq = jax.random.uniform(k_wq, (dim, dim), jnp.float32, -bound, bound)
    bq = jax.random.uniform(k_bq, (dim,), jnp.float32, -bound, bound)
    wk = jax.random.uniform(k_wk, (dim, dim), jnp.float32, -bound, bound)
    bk = jax.random.uniform(k_bk, (dim,), jnp.float32, -bound, bound)

    # Pad / transpose / scale-fold the weights once; reuse across calls.
    params = prepare_params(wq, bq, wk, bk)
    fwd = jax.jit(simple_vit_attention_prepared)

    # 1) Mirror the PyTorch driver: x = x.view(1, -1)[:, :16]  ->  shape (1, 16).
    x1 = jax.random.normal(k_x, (1, dim), dtype=jnp.float32)
    attn1 = jax.block_until_ready(fwd(x1, *params))
    assert attn1.shape == (1, 1), attn1.shape
    assert abs(float(attn1[0, 0]) - 1.0) < 1e-4, attn1

    # 2) Non-degenerate check (S=8): projections / scale / masking / softmax
    #    (bf16 MXU path -> loose-but-safe tolerance vs f32 reference).
    x8 = jax.random.normal(k_x, (8, dim), dtype=jnp.float32)
    attn8 = jax.block_until_ready(fwd(x8, *params))
    ref8 = _reference(x8, wq, bq, wk, bk)
    assert attn8.shape == (8, 8), attn8.shape
    assert jnp.allclose(attn8, ref8, atol=1e-2, rtol=1e-2), (attn8, ref8)
    assert jnp.allclose(jnp.sum(attn8, axis=-1), 1.0, atol=1e-4)

    print("KERNEL_OK")
</pallas_src>

<mosaic_0001>
module attributes {stable_mosaic.version = 11 : i64} {
  func.func @_vit_attn_kernel(%arg0: i32, %arg1: memref<128x128xbf16, #tpu.memory_space<vmem>>, %arg2: memref<128x128xbf16, #tpu.memory_space<vmem>>, %arg3: memref<1x128xf32, #tpu.memory_space<vmem>>, %arg4: memref<128x128xbf16, #tpu.memory_space<vmem>>, %arg5: memref<128x128xf32, #tpu.memory_space<vmem>>) attributes {dimension_semantics = [#tpu.dimension_semantics<parallel>], iteration_bounds = array<i64: 1>, scalar_prefetch = 0 : i64, scratch_operands = 0 : i64, tpu.core_type = #tpu.core_type<tc>, window_params = [{transform_indices = @transform_0, window_bounds = array<i64: 128, 128>}, {pipeline_mode = #tpu.pipeline_mode<synchronous>, transform_indices = @transform_1, window_bounds = array<i64: 128, 128>}, {pipeline_mode = #tpu.pipeline_mode<synchronous>, transform_indices = @transform_2, window_bounds = array<i64: 1, 128>}, {pipeline_mode = #tpu.pipeline_mode<synchronous>, transform_indices = @transform_3, window_bounds = array<i64: 128, 128>}, {transform_indices = @transform_4, window_bounds = array<i64: 128, 128>}]} {
    %c0 = arith.constant 0 : index
    %c0_0 = arith.constant 0 : index
    %0 = vector.load %arg1[%c0, %c0_0] : memref<128x128xbf16, #tpu.memory_space<vmem>>, vector<128x128xbf16>
    %c0_1 = arith.constant 0 : index
    %c0_2 = arith.constant 0 : index
    %1 = vector.load %arg2[%c0_1, %c0_2] : memref<128x128xbf16, #tpu.memory_space<vmem>>, vector<128x128xbf16>
    %cst = arith.constant dense<0.000000e+00> : vector<128x128xf32>
    %2 = tpu.matmul %0, %1, %cst {dimension_numbers = #tpu.dot_dimension_numbers<[1], [0], [0], [1], [0, 0, 1, 1], [], []>} : vector<128x128xbf16>, vector<128x128xbf16>, vector<128x128xf32> -> vector<128x128xf32>
    %c0_3 = arith.constant 0 : index
    %c0_4 = arith.constant 0 : index
    %3 = vector.load %arg3[%c0_3, %c0_4] : memref<1x128xf32, #tpu.memory_space<vmem>>, vector<1x128xf32>
    %4 = vector.broadcast %3 : vector<1x128xf32> to vector<128x128xf32>
    %5 = arith.addf %2, %4 : vector<128x128xf32>
    %6 = arith.truncf %5 : vector<128x128xf32> to vector<128x128xbf16>
    %c0_5 = arith.constant 0 : index
    %c0_6 = arith.constant 0 : index
    %7 = vector.load %arg4[%c0_5, %c0_6] : memref<128x128xbf16, #tpu.memory_space<vmem>>, vector<128x128xbf16>
    %cst_7 = arith.constant dense<0.000000e+00> : vector<128x128xf32>
    %8 = tpu.matmul %6, %7, %cst_7 {dimension_numbers = #tpu.dot_dimension_numbers<[1], [0], [0], [1], [0, 0, 1, 1], [], []>} : vector<128x128xbf16>, vector<128x128xbf16>, vector<128x128xf32> -> vector<128x128xf32>
    %9 = tpu.iota {dimensions = array<i32: 1>} : vector<128x128xi32>
    %c1_i32 = arith.constant 1 : i32
    %10 = vector.broadcast %c1_i32 : i32 to vector<128x128xi32>
    %11 = arith.cmpi slt, %9, %10 : vector<128x128xi32>
    %cst_8 = arith.constant -1.000000e+30 : f32
    %12 = vector.broadcast %cst_8 : f32 to vector<128x128xf32>
    %13 = arith.select %11, %8, %12 : vector<128x128xi1>, vector<128x128xf32>
    %cst_9 = arith.constant dense<0xFF800000> : vector<128xf32>
    %14 = vector.multi_reduction <maximumf>, %13, %cst_9 [1] : vector<128x128xf32> to vector<128xf32>
    %15 = vector.shape_cast %14 : vector<128xf32> to vector<128x1xf32>
    %16 = vector.broadcast %15 : vector<128x1xf32> to vector<128x128xf32>
    %17 = arith.subf %13, %16 : vector<128x128xf32>
    %18 = math.exp %17 : vector<128x128xf32>
    %cst_10 = arith.constant dense<0.000000e+00> : vector<128xf32>
    %19 = vector.multi_reduction <add>, %18, %cst_10 [1] : vector<128x128xf32> to vector<128xf32>
    %20 = vector.shape_cast %19 : vector<128xf32> to vector<128x1xf32>
    %21 = vector.broadcast %20 : vector<128x1xf32> to vector<128x128xf32>
    %22 = arith.divf %18, %21 : vector<128x128xf32>
    %c0_11 = arith.constant 0 : index
    %c0_12 = arith.constant 0 : index
    %23 = vector.load %arg5[%c0_11, %c0_12] : memref<128x128xf32, #tpu.memory_space<vmem>>, vector<128x128xf32>
    tpu.vector_store %arg5[%c0_11, %c0_12], %22 {strides = array<i32>} : memref<128x128xf32, #tpu.memory_space<vmem>>, vector<128x128xf32>,
    return
  }
  func.func @transform_0(%arg0: i32) -> (i32, i32) {
    %c0_i32 = arith.constant 0 : i32
    %c0_i32_0 = arith.constant 0 : i32
    return %arg0, %c0_i32 : i32, i32
  }
  func.func @transform_1(%arg0: i32) -> (i32, i32) {
    %c0_i32 = arith.constant 0 : i32
    %c0_i32_0 = arith.constant 0 : i32
    %c0_i32_1 = arith.constant 0 : i32
    return %c0_i32, %c0_i32_0 : i32, i32
  }
  func.func @transform_2(%arg0: i32) -> (i32, i32) {
    %c0_i32 = arith.constant 0 : i32
    %c0_i32_0 = arith.constant 0 : i32
    %c0_i32_1 = arith.constant 0 : i32
    return %c0_i32, %c0_i32_0 : i32, i32
  }
  func.func @transform_3(%arg0: i32) -> (i32, i32) {
    %c0_i32 = arith.constant 0 : i32
    %c0_i32_0 = arith.constant 0 : i32
    %c0_i32_1 = arith.constant 0 : i32
    return %c0_i32, %c0_i32_0 : i32, i32
  }
  func.func @transform_4(%arg0: i32) -> (i32, i32) {
    %c0_i32 = arith.constant 0 : i32
    %c0_i32_0 = arith.constant 0 : i32
    return %arg0, %c0_i32 : i32, i32
  }
}

module attributes {stable_mosaic.version = 11 : i64} {
  func.func @_project_kt_kernel(%arg0: memref<128x128xbf16, #tpu.memory_space<vmem>>, %arg1: memref<128x128xbf16, #tpu.memory_space<vmem>>, %arg2: memref<1x128xf32, #tpu.memory_space<vmem>>, %arg3: memref<128x128xbf16, #tpu.memory_space<vmem>>) attributes {dimension_semantics = [], scalar_prefetch = 0 : i64, scratch_operands = 0 : i64, tpu.core_type = #tpu.core_type<tc>} {
    %c0 = arith.constant 0 : index
    %c0_0 = arith.constant 0 : index
    %0 = vector.load %arg0[%c0, %c0_0] : memref<128x128xbf16, #tpu.memory_space<vmem>>, vector<128x128xbf16>
    %c0_1 = arith.constant 0 : index
    %c0_2 = arith.constant 0 : index
    %1 = vector.load %arg1[%c0_1, %c0_2] : memref<128x128xbf16, #tpu.memory_space<vmem>>, vector<128x128xbf16>
    %cst = arith.constant dense<0.000000e+00> : vector<128x128xf32>
    %2 = tpu.matmul %0, %1, %cst {dimension_numbers = #tpu.dot_dimension_numbers<[1], [0], [0], [1], [0, 0, 1, 1], [], []>} : vector<128x128xbf16>, vector<128x128xbf16>, vector<128x128xf32> -> vector<128x128xf32>
    %c0_3 = arith.constant 0 : index
    %c0_4 = arith.constant 0 : index
    %3 = vector.load %arg2[%c0_3, %c0_4] : memref<1x128xf32, #tpu.memory_space<vmem>>, vector<1x128xf32>
    %4 = vector.broadcast %3 : vector<1x128xf32> to vector<128x128xf32>
    %5 = arith.addf %2, %4 : vector<128x128xf32>
    %6 = tpu.transpose %5, [1, 0] : vector<128x128xf32> -> vector<128x128xf32>
    %7 = arith.truncf %6 : vector<128x128xf32> to vector<128x128xbf16>
    %c0_5 = arith.constant 0 : index
    %c0_6 = arith.constant 0 : index
    %8 = vector.load %arg3[%c0_5, %c0_6] : memref<128x128xbf16, #tpu.memory_space<vmem>>, vector<128x128xbf16>
    tpu.vector_store %arg3[%c0_5, %c0_6], %7 {strides = array<i32>} : memref<128x128xbf16, #tpu.memory_space<vmem>>, vector<128x128xbf16>,
    return
  }
}

</mosaic_0001>

<llo_original>
// kernel: simple_vit_attention_prepared.2
$region0: #{simple_vit_attention_prepared.2}
  #allocation0 [shape = 'u32[]', space=smem, size = 0x4, offset = 0x4, fixed_abs, tag = 'smem constant byte address 0x4 - core index']
  #allocation1 [shape = 'u32[144,128]{1,0:T(1,128)}', space=vmem, size = 0x12000, scoped, tag = 'internal scratch']
  %s0 = inlined_call_operand.vmem [shape: bf16[128,128], index: 0, kind: input, shape index: {}]
  %s1 = inlined_call_operand.vmem [shape: bf16[128,128], index: 1, kind: input, shape index: {}]
  %s2 = inlined_call_operand.vmem [shape: f32[1,128], index: 2, kind: input, shape index: {}]
  %s3 = inlined_call_operand.vmem [shape: bf16[128,128], index: 3, kind: output, shape index: {}]
  %s4 = sld [smem:[#allocation0]]
  $region22: #{simple_vit_attention_prepared.2} parent=0
    _
  %s6 = ssub.s32 1, %s4
  %s7 = scalar_select 0, %s6, %s4
  // Predicated region
  $region2: #{simple_vit_attention_prepared.2} parent=0 // pred_check
    _
  $region3: #{simple_vit_attention_prepared.2} parent=0 // pred_check_branch
    %9 = sbr.rel (0) target = $region5
  $region4: #{simple_vit_attention_prepared.2} parent=0 // pred_region
    _
  $region5: #{simple_vit_attention_prepared.2} parent=0 // pred_fallthru
    _
  // Predicated region
  $region6: #{simple_vit_attention_prepared.2} parent=0 // pred_check
    _
  $region7: #{simple_vit_attention_prepared.2} parent=0 // pred_check_branch
    %11 = sbr.rel (0) target = $region9
  $region8: #{simple_vit_attention_prepared.2} parent=0 // pred_region
    _
  $region9: #{simple_vit_attention_prepared.2} parent=0 // pred_fallthru
    _
  // Predicated region
  $region10: #{simple_vit_attention_prepared.2} parent=0 // pred_check
    _
  $region11: #{simple_vit_attention_prepared.2} parent=0 // pred_check_branch
    %13 = sbr.rel (0) target = $region13
  $region12: #{simple_vit_attention_prepared.2} parent=0 // pred_region
    _
  $region13: #{simple_vit_attention_prepared.2} parent=0 // pred_fallthru
    _
  %v15 = vld [vmem:[%s0] sm:$0xf]
  %v16 = vld [vmem:[%s0 + $0x4] sm:$0xf]
  %v17 = vld [vmem:[%s0 + $0x8] sm:$0xf]
  %v18 = vld [vmem:[%s0 + $0xc] sm:$0xf]
  %v19 = vld [vmem:[%s0 + $0x10] sm:$0xf]
  %v20 = vld [vmem:[%s0 + $0x14] sm:$0xf]
  %v21 = vld [vmem:[%s0 + $0x18] sm:$0xf]
  %v22 = vld [vmem:[%s0 + $0x1c] sm:$0xf]
  %v23 = vld [vmem:[%s0 + $0x20] sm:$0xf]
  %v24 = vld [vmem:[%s0 + $0x24] sm:$0xf]
  %v25 = vld [vmem:[%s0 + $0x28] sm:$0xf]
  %v26 = vld [vmem:[%s0 + $0x2c] sm:$0xf]
  %v27 = vld [vmem:[%s0 + $0x30] sm:$0xf]
  %v28 = vld [vmem:[%s0 + $0x34] sm:$0xf]
  %v29 = vld [vmem:[%s0 + $0x38] sm:$0xf]
  %v30 = vld [vmem:[%s0 + $0x3c] sm:$0xf]
  %v31 = vld [vmem:[%s1] sm:$0xf]
  %v32 = vld [vmem:[%s1 + $0x4] sm:$0xf]
  %v33 = vld [vmem:[%s1 + $0x8] sm:$0xf]
  %v34 = vld [vmem:[%s1 + $0xc] sm:$0xf]
  %v35 = vld [vmem:[%s1 + $0x10] sm:$0xf]
  %v36 = vld [vmem:[%s1 + $0x14] sm:$0xf]
  %v37 = vld [vmem:[%s1 + $0x18] sm:$0xf]
  %v38 = vld [vmem:[%s1 + $0x1c] sm:$0xf]
  %v39 = vld [vmem:[%s1 + $0x20] sm:$0xf]
  %v40 = vld [vmem:[%s1 + $0x24] sm:$0xf]
  %v41 = vld [vmem:[%s1 + $0x28] sm:$0xf]
  %v42 = vld [vmem:[%s1 + $0x2c] sm:$0xf]
  %v43 = vld [vmem:[%s1 + $0x30] sm:$0xf]
  %v44 = vld [vmem:[%s1 + $0x34] sm:$0xf]
  %v45 = vld [vmem:[%s1 + $0x38] sm:$0xf]
  %v46 = vld [vmem:[%s1 + $0x3c] sm:$0xf]
  %v47 = vld [vmem:[%s2] sm:$0x1]
  %v49 = vlaneseq
  %v50 = vshrl.u32 %v49, 7
  %v51 = vsub.s32 0, %v50
  %v52 = vrot.slane %v47, %v51
  %v70 = vunpack.c.l.b16 %v15
  %v71 = vunpack.c.l.b16 %v16
  %v72 = vunpack.c.l.b16 %v17
  %v73 = vunpack.c.l.b16 %v18
  %v74 = vunpack.c.l.b16 %v19
  %v75 = vunpack.c.l.b16 %v20
  %v76 = vunpack.c.l.b16 %v21
  %v77 = vunpack.c.l.b16 %v22
  %v78 = vunpack.c.l.b16 %v23
  %v79 = vunpack.c.l.b16 %v24
  %v80 = vunpack.c.l.b16 %v25
  %v81 = vunpack.c.l.b16 %v26
  %v82 = vunpack.c.l.b16 %v27
  %v83 = vunpack.c.l.b16 %v28
  %v84 = vunpack.c.l.b16 %v29
  %v85 = vunpack.c.l.b16 %v30
  %v86 = vpack.c.b16 %v71, %v70
  %v87 = vpack.c.b16 %v73, %v72
  %v88 = vpack.c.b16 %v75, %v74
  %v89 = vpack.c.b16 %v77, %v76
  %v90 = vpack.c.b16 %v79, %v78
  %v91 = vpack.c.b16 %v81, %v80
  %v92 = vpack.c.b16 %v83, %v82
  %v93 = vpack.c.b16 %v85, %v84
  %v118 = vunpack.c.l.b16 %v31
  %v119 = vunpack.c.l.b16 %v32
  %v120 = vunpack.c.l.b16 %v33
  %v121 = vunpack.c.l.b16 %v34
  %v122 = vunpack.c.l.b16 %v35
  %v123 = vunpack.c.l.b16 %v36
  %v124 = vunpack.c.l.b16 %v37
  %v125 = vunpack.c.l.b16 %v38
  %v126 = vunpack.c.l.b16 %v39
  %v127 = vunpack.c.l.b16 %v40
  %v128 = vunpack.c.l.b16 %v41
  %v129 = vunpack.c.l.b16 %v42
  %v130 = vunpack.c.l.b16 %v43
  %v131 = vunpack.c.l.b16 %v44
  %v132 = vunpack.c.l.b16 %v45
  %v133 = vunpack.c.l.b16 %v46
  %v134 = vpack.c.b16 %v119, %v118
  %v135 = vpack.c.b16 %v121, %v120
  %v136 = vpack.c.b16 %v123, %v122
  %v137 = vpack.c.b16 %v125, %v124
  %v138 = vpack.c.b16 %v127, %v126
  %v139 = vpack.c.b16 %v129, %v128
  %v140 = vpack.c.b16 %v131, %v130
  %v141 = vpack.c.b16 %v133, %v132
  %150 = vmatprep.subr.bf16.mxu0 0
  %151 = vmatpush1.bf16.msra.mxu0 %v134
  %152 = vmatprep.subr.bf16.mxu0 0
  %153 = vmatpush1.bf16.msra.mxu0 %v135
  %154 = vmatprep.subr.bf16.mxu0 0
  %155 = vmatpush1.bf16.msra.mxu0 %v136
  %156 = vmatprep.subr.bf16.mxu0 0
  %157 = vmatpush1.bf16.msra.mxu0 %v137
  %158 = vmatprep.subr.bf16.mxu0 0
  %159 = vmatpush1.bf16.msra.mxu0 %v138
  %160 = vmatprep.subr.bf16.mxu0 0
  %161 = vmatpush1.bf16.msra.mxu0 %v139
  %162 = vmatprep.subr.bf16.mxu0 0
  %163 = vmatpush1.bf16.msra.mxu0 %v140
  %164 = vmatprep.subr.bf16.mxu0 0
  %165 = vmatpush1.bf16.msra.mxu0 %v141
  %166 = vmatprep.subr.bf16.mxu0 0
  %167 = vmatpush1.bf16.msra.mxu0 0
  %168 = vmatprep.subr.bf16.mxu0 0
  %169 = vmatpush1.bf16.msra.mxu0 0
  %170 = vmatprep.subr.bf16.mxu0 0
  %171 = vmatpush1.bf16.msra.mxu0 0
  %172 = vmatprep.subr.bf16.mxu0 0
  %173 = vmatpush1.bf16.msra.mxu0 0
  %174 = vmatprep.subr.bf16.mxu0 0
  %175 = vmatpush1.bf16.msra.mxu0 0
  %176 = vmatprep.subr.bf16.mxu0 0
  %177 = vmatpush1.bf16.msra.mxu0 0
  %178 = vmatprep.subr.bf16.mxu0 0
  %179 = vmatpush1.bf16.msra.mxu0 0
  %180 = vmatprep.subr.bf16.mxu0 0
  %181 = vmatpush1.bf16.msra.mxu0 0
  %182 = vmatprep.mubr.bf16.mxu0 0
  %183 = vmatmul.mubr.bf16.gmra.mrb[0].mxu0 %v86
  %v184 = vpop.f32.mrb[0].mxu0
  %v185 = vadd.f32 %v52, %v184
  %v186 = vpop.f32.mrb[0].mxu0
  %v187 = vpop.f32.mrb[0].mxu0
  %v188 = vadd.f32 %v52, %v187
  %v189 = vpop.f32.mrb[0].mxu0
  %190 = vmatprep.mubr.bf16.mxu0 0
  %191 = vmatmul.mubr.bf16.gmra.mrb[0].mxu0 %v87
  %v192 = vpop.f32.mrb[0].mxu0
  %v193 = vadd.f32 %v52, %v192
  %v194 = vpop.f32.mrb[0].mxu0
  %v195 = vpop.f32.mrb[0].mxu0
  %v196 = vadd.f32 %v52, %v195
  %v197 = vpop.f32.mrb[0].mxu0
  %198 = vmatprep.mubr.bf16.mxu0 0
  %199 = vmatmul.mubr.bf16.gmra.mrb[0].mxu0 %v88
  %v200 = vpop.f32.mrb[0].mxu0
  %v201 = vadd.f32 %v52, %v200
  %v202 = vpop.f32.mrb[0].mxu0
  %v203 = vpop.f32.mrb[0].mxu0
  %v204 = vadd.f32 %v52, %v203
  %v205 = vpop.f32.mrb[0].mxu0
  %206 = vmatprep.mubr.bf16.mxu0 0
  %207 = vmatmul.mubr.bf16.gmra.mrb[0].mxu0 %v89
  %v208 = vpop.f32.mrb[0].mxu0
  %v209 = vadd.f32 %v52, %v208
  %v210 = vpop.f32.mrb[0].mxu0
  %v211 = vpop.f32.mrb[0].mxu0
  %v212 = vadd.f32 %v52, %v211
  %v213 = vpop.f32.mrb[0].mxu0
  %214 = vmatprep.mubr.bf16.mxu0 0
  %215 = vmatmul.mubr.bf16.gmra.mrb[0].mxu0 %v90
  %v216 = vpop.f32.mrb[0].mxu0
  %v217 = vadd.f32 %v52, %v216
  %v218 = vpop.f32.mrb[0].mxu0
  %v219 = vpop.f32.mrb[0].mxu0
  %v220 = vadd.f32 %v52, %v219
  %v221 = vpop.f32.mrb[0].mxu0
  %222 = vmatprep.mubr.bf16.mxu0 0
  %223 = vmatmul.mubr.bf16.gmra.mrb[0].mxu0 %v91
  %v224 = vpop.f32.mrb[0].mxu0
  %v225 = vadd.f32 %v52, %v224
  %v226 = vpop.f32.mrb[0].mxu0
  %v227 = vpop.f32.mrb[0].mxu0
  %v228 = vadd.f32 %v52, %v227
  %v229 = vpop.f32.mrb[0].mxu0
  %230 = vmatprep.mubr.bf16.mxu0 0
  %231 = vmatmul.mubr.bf16.gmra.mrb[0].mxu0 %v92
  %v232 = vpop.f32.mrb[0].mxu0
  %v233 = vadd.f32 %v52, %v232
  %v234 = vpop.f32.mrb[0].mxu0
  %v235 = vpop.f32.mrb[0].mxu0
  %v236 = vadd.f32 %v52, %v235
  %v237 = vpop.f32.mrb[0].mxu0
  %238 = vmatprep.mubr.bf16.mxu0 0
  %239 = vmatmul.mubr.bf16.gmra.mrb[0].mxu0 %v93
  %v240 = vpop.f32.mrb[0].mxu0
  %v241 = vadd.f32 %v52, %v240
  %v242 = vpop.f32.mrb[0].mxu0
  %v243 = vpop.f32.mrb[0].mxu0
  %v244 = vadd.f32 %v52, %v243
  %v245 = vpop.f32.mrb[0].mxu0
  %246 = vdwg.mxu0
  %247 = vxpose.xlu0.b32.start [1/16] %v185, 128
  %248 = vxpose.xlu0.b32.cont [2/16] %v188, 128
  %249 = vxpose.xlu0.b32.cont [3/16] %v193, 128
  %250 = vxpose.xlu0.b32.cont [4/16] %v196, 128
  %251 = vxpose.xlu0.b32.cont [5/16] %v201, 128
  %252 = vxpose.xlu0.b32.cont [6/16] %v204, 128
  %253 = vxpose.xlu0.b32.cont [7/16] %v209, 128
  %254 = vxpose.xlu0.b32.cont [8/16] %v212, 128
  %255 = vxpose.xlu0.b32.cont [9/16] %v217, 128
  %256 = vxpose.xlu0.b32.cont [10/16] %v220, 128
  %257 = vxpose.xlu0.b32.cont [11/16] %v225, 128
  %258 = vxpose.xlu0.b32.cont [12/16] %v228, 128
  %259 = vxpose.xlu0.b32.cont [13/16] %v233, 128
  %260 = vxpose.xlu0.b32.cont [14/16] %v236, 128
  %261 = vxpose.xlu0.b32.cont [15/16] %v241, 128
  %262 = vxpose.xlu0.b32.end [16/16] %v244, 128
  %v263 = vpop.trf.xlu0
  %v264 = vpop.trf.xlu0
  %v265 = vpop.trf.xlu0
  %v266 = vpop.trf.xlu0
  %v267 = vpop.trf.xlu0
  %v268 = vpop.trf.xlu0
  %v269 = vpop.trf.xlu0
  %v270 = vpop.trf.xlu0
  %v271 = vpop.trf.xlu0
  %v272 = vpop.trf.xlu0
  %v273 = vpop.trf.xlu0
  %v274 = vpop.trf.xlu0
  %v275 = vpop.trf.xlu0
  %v276 = vpop.trf.xlu0
  %v277 = vpop.trf.xlu0
  %v278 = vpop.trf.xlu0
  %v279 = vpack.c.bf16 %v264, %v263
  %v280 = vpack.c.bf16 %v266, %v265
  %v281 = vpack.c.bf16 %v268, %v267
  %v282 = vpack.c.bf16 %v270, %v269
  %v283 = vpack.c.bf16 %v272, %v271
  %v284 = vpack.c.bf16 %v274, %v273
  %v285 = vpack.c.bf16 %v276, %v275
  %v286 = vpack.c.bf16 %v278, %v277
  %v295 = vunpack.c.l.b16 %v279
  %v296 = vunpack.c.h.b16 %v279
  %v297 = vunpack.c.l.b16 %v280
  %v298 = vunpack.c.h.b16 %v280
  %v299 = vunpack.c.l.b16 %v281
  %v300 = vunpack.c.h.b16 %v281
  %v301 = vunpack.c.l.b16 %v282
  %v302 = vunpack.c.h.b16 %v282
  %v303 = vunpack.c.l.b16 %v283
  %v304 = vunpack.c.h.b16 %v283
  %v305 = vunpack.c.l.b16 %v284
  %v306 = vunpack.c.h.b16 %v284
  %v307 = vunpack.c.l.b16 %v285
  %v308 = vunpack.c.h.b16 %v285
  %v309 = vunpack.c.l.b16 %v286
  %v310 = vunpack.c.h.b16 %v286
  %v311 = vpack.c.b16 %v295, %v295
  %v312 = vpack.c.b16 %v296, %v296
  %v313 = vpack.c.b16 %v297, %v297
  %v314 = vpack.c.b16 %v298, %v298
  %v315 = vpack.c.b16 %v299, %v299
  %v316 = vpack.c.b16 %v300, %v300
  %v317 = vpack.c.b16 %v301, %v301
  %v318 = vpack.c.b16 %v302, %v302
  %v319 = vpack.c.b16 %v303, %v303
  %v320 = vpack.c.b16 %v304, %v304
  %v321 = vpack.c.b16 %v305, %v305
  %v322 = vpack.c.b16 %v306, %v306
  %v323 = vpack.c.b16 %v307, %v307
  %v324 = vpack.c.b16 %v308, %v308
  %v325 = vpack.c.b16 %v309, %v309
  %v326 = vpack.c.b16 %v310, %v310
  %343 = vst [vmem:[%s3] sm:$0xf] %v311
  %344 = vst [vmem:[%s3 + $0x4] sm:$0xf] %v312
  %345 = vst [vmem:[%s3 + $0x8] sm:$0xf] %v313
  %346 = vst [vmem:[%s3 + $0xc] sm:$0xf] %v314
  %347 = vst [vmem:[%s3 + $0x10] sm:$0xf] %v315
  %348 = vst [vmem:[%s3 + $0x14] sm:$0xf] %v316
  %349 = vst [vmem:[%s3 + $0x18] sm:$0xf] %v317
  %350 = vst [vmem:[%s3 + $0x1c] sm:$0xf] %v318
  %351 = vst [vmem:[%s3 + $0x20] sm:$0xf] %v319
  %352 = vst [vmem:[%s3 + $0x24] sm:$0xf] %v320
  %353 = vst [vmem:[%s3 + $0x28] sm:$0xf] %v321
  %354 = vst [vmem:[%s3 + $0x2c] sm:$0xf] %v322
  %355 = vst [vmem:[%s3 + $0x30] sm:$0xf] %v323
  %356 = vst [vmem:[%s3 + $0x34] sm:$0xf] %v324
  %357 = vst [vmem:[%s3 + $0x38] sm:$0xf] %v325
  %358 = vst [vmem:[%s3 + $0x3c] sm:$0xf] %v326
  // Predicated region
  $region14: #{simple_vit_attention_prepared.2} parent=0 // pred_check
    _
  $region15: #{simple_vit_attention_prepared.2} parent=0 // pred_check_branch
    %360 = sbr.rel (0) target = $region17
  $region16: #{simple_vit_attention_prepared.2} parent=0 // pred_region
    _
  $region17: #{simple_vit_attention_prepared.2} parent=0 // pred_fallthru
    _
  // Predicated region
  $region18: #{simple_vit_attention_prepared.2} parent=0 // pred_check
    _
  $region19: #{simple_vit_attention_prepared.2} parent=0 // pred_check_branch
    %362 = sbr.rel (0) target = $region21
  $region20: #{simple_vit_attention_prepared.2} parent=0 // pred_region
    _
  $region21: #{simple_vit_attention_prepared.2} parent=0 // pred_fallthru
    _

// kernel: simple_vit_attention_prepared.3
$region0: #{simple_vit_attention_prepared.3}
  #allocation0 [shape = 'u32[]', space=smem, size = 0x4, offset = 0x4, fixed_abs, tag = 'smem constant byte address 0x4 - core index']
  #allocation1 [shape = 'u32[144,128]{1,0:T(1,128)}', space=vmem, size = 0x12000, scoped, tag = 'internal scratch']
  %s0 = inlined_call_operand.vmem [shape: bf16[128,128], index: 0, kind: input, shape index: {}]
  %s1 = inlined_call_operand.vmem [shape: bf16[128,128], index: 1, kind: input, shape index: {}]
  %s2 = inlined_call_operand.vmem [shape: f32[1,128], index: 2, kind: input, shape index: {}]
  %s3 = inlined_call_operand.vmem [shape: bf16[128,128], index: 3, kind: input, shape index: {}]
  %s4 = inlined_call_operand.vmem [shape: f32[128,128], index: 4, kind: output, shape index: {}]
  %s5 = sld [smem:[#allocation0]]
  $region26: #{simple_vit_attention_prepared.3} parent=0
    _
  %s7 = ssub.s32 1, %s5
  %s8 = scalar_select 0, %s7, %s5
  // Predicated region
  $region2: #{simple_vit_attention_prepared.3} parent=0 // pred_check
    _
  $region3: #{simple_vit_attention_prepared.3} parent=0 // pred_check_branch
    %10 = sbr.rel (0) target = $region5
  $region4: #{simple_vit_attention_prepared.3} parent=0 // pred_region
    _
  $region5: #{simple_vit_attention_prepared.3} parent=0 // pred_fallthru
    _
  // Predicated region
  $region6: #{simple_vit_attention_prepared.3} parent=0 // pred_check
    _
  $region7: #{simple_vit_attention_prepared.3} parent=0 // pred_check_branch
    %12 = sbr.rel (0) target = $region9
  $region8: #{simple_vit_attention_prepared.3} parent=0 // pred_region
    _
  $region9: #{simple_vit_attention_prepared.3} parent=0 // pred_fallthru
    _
  // Predicated region
  $region10: #{simple_vit_attention_prepared.3} parent=0 // pred_check
    _
  $region11: #{simple_vit_attention_prepared.3} parent=0 // pred_check_branch
    %14 = sbr.rel (0) target = $region13
  $region12: #{simple_vit_attention_prepared.3} parent=0 // pred_region
    _
  $region13: #{simple_vit_attention_prepared.3} parent=0 // pred_fallthru
    _
  // Predicated region
  $region14: #{simple_vit_attention_prepared.3} parent=0 // pred_check
    _
  $region15: #{simple_vit_attention_prepared.3} parent=0 // pred_check_branch
    %16 = sbr.rel (0) target = $region17
  $region16: #{simple_vit_attention_prepared.3} parent=0 // pred_region
    _
  $region17: #{simple_vit_attention_prepared.3} parent=0 // pred_fallthru
    _
  %v18 = vld [vmem:[%s0] sm:$0xf]
  %v19 = vld [vmem:[%s0 + $0x4] sm:$0xf]
  %v20 = vld [vmem:[%s0 + $0x8] sm:$0xf]
  %v21 = vld [vmem:[%s0 + $0xc] sm:$0xf]
  %v22 = vld [vmem:[%s0 + $0x10] sm:$0xf]
  %v23 = vld [vmem:[%s0 + $0x14] sm:$0xf]
  %v24 = vld [vmem:[%s0 + $0x18] sm:$0xf]
  %v25 = vld [vmem:[%s0 + $0x1c] sm:$0xf]
  %v26 = vld [vmem:[%s0 + $0x20] sm:$0xf]
  %v27 = vld [vmem:[%s0 + $0x24] sm:$0xf]
  %v28 = vld [vmem:[%s0 + $0x28] sm:$0xf]
  %v29 = vld [vmem:[%s0 + $0x2c] sm:$0xf]
  %v30 = vld [vmem:[%s0 + $0x30] sm:$0xf]
  %v31 = vld [vmem:[%s0 + $0x34] sm:$0xf]
  %v32 = vld [vmem:[%s0 + $0x38] sm:$0xf]
  %v33 = vld [vmem:[%s0 + $0x3c] sm:$0xf]
  %v34 = vld [vmem:[%s1] sm:$0xf]
  %v35 = vld [vmem:[%s1 + $0x4] sm:$0xf]
  %v36 = vld [vmem:[%s1 + $0x8] sm:$0xf]
  %v37 = vld [vmem:[%s1 + $0xc] sm:$0xf]
  %v38 = vld [vmem:[%s1 + $0x10] sm:$0xf]
  %v39 = vld [vmem:[%s1 + $0x14] sm:$0xf]
  %v40 = vld [vmem:[%s1 + $0x18] sm:$0xf]
  %v41 = vld [vmem:[%s1 + $0x1c] sm:$0xf]
  %v42 = vld [vmem:[%s1 + $0x20] sm:$0xf]
  %v43 = vld [vmem:[%s1 + $0x24] sm:$0xf]
  %v44 = vld [vmem:[%s1 + $0x28] sm:$0xf]
  %v45 = vld [vmem:[%s1 + $0x2c] sm:$0xf]
  %v46 = vld [vmem:[%s1 + $0x30] sm:$0xf]
  %v47 = vld [vmem:[%s1 + $0x34] sm:$0xf]
  %v48 = vld [vmem:[%s1 + $0x38] sm:$0xf]
  %v49 = vld [vmem:[%s1 + $0x3c] sm:$0xf]
  %v50 = vld [vmem:[%s2] sm:$0x1]
  %v52 = vlaneseq
  %v53 = vshrl.u32 %v52, 7
  %v54 = vsub.s32 0, %v53
  %v55 = vrot.slane %v50, %v54
  %v73 = vunpack.c.l.b16 %v18
  %v74 = vunpack.c.l.b16 %v19
  %v75 = vunpack.c.l.b16 %v20
  %v76 = vunpack.c.l.b16 %v21
  %v77 = vunpack.c.l.b16 %v22
  %v78 = vunpack.c.l.b16 %v23
  %v79 = vunpack.c.l.b16 %v24
  %v80 = vunpack.c.l.b16 %v25
  %v81 = vunpack.c.l.b16 %v26
  %v82 = vunpack.c.l.b16 %v27
  %v83 = vunpack.c.l.b16 %v28
  %v84 = vunpack.c.l.b16 %v29
  %v85 = vunpack.c.l.b16 %v30
  %v86 = vunpack.c.l.b16 %v31
  %v87 = vunpack.c.l.b16 %v32
  %v88 = vunpack.c.l.b16 %v33
  %v89 = vpack.c.b16 %v74, %v73
  %v90 = vpack.c.b16 %v76, %v75
  %v91 = vpack.c.b16 %v78, %v77
  %v92 = vpack.c.b16 %v80, %v79
  %v93 = vpack.c.b16 %v82, %v81
  %v94 = vpack.c.b16 %v84, %v83
  %v95 = vpack.c.b16 %v86, %v85
  %v96 = vpack.c.b16 %v88, %v87
  %v121 = vunpack.c.l.b16 %v34
  %v122 = vunpack.c.l.b16 %v35
  %v123 = vunpack.c.l.b16 %v36
  %v124 = vunpack.c.l.b16 %v37
  %v125 = vunpack.c.l.b16 %v38
  %v126 = vunpack.c.l.b16 %v39
  %v127 = vunpack.c.l.b16 %v40
  %v128 = vunpack.c.l.b16 %v41
  %v129 = vunpack.c.l.b16 %v42
  %v130 = vunpack.c.l.b16 %v43
  %v131 = vunpack.c.l.b16 %v44
  %v132 = vunpack.c.l.b16 %v45
  %v133 = vunpack.c.l.b16 %v46
  %v134 = vunpack.c.l.b16 %v47
  %v135 = vunpack.c.l.b16 %v48
  %v136 = vunpack.c.l.b16 %v49
  %v137 = vpack.c.b16 %v122, %v121
  %v138 = vpack.c.b16 %v124, %v123
  %v139 = vpack.c.b16 %v126, %v125
  %v140 = vpack.c.b16 %v128, %v127
  %v141 = vpack.c.b16 %v130, %v129
  %v142 = vpack.c.b16 %v132, %v131
  %v143 = vpack.c.b16 %v134, %v133
  %v144 = vpack.c.b16 %v136, %v135
  %153 = vmatprep.subr.bf16.mxu0 0
  %154 = vmatpush1.bf16.msra.mxu0 %v137
  %155 = vmatprep.subr.bf16.mxu0 0
  %156 = vmatpush1.bf16.msra.mxu0 %v138
  %157 = vmatprep.subr.bf16.mxu0 0
  %158 = vmatpush1.bf16.msra.mxu0 %v139
  %159 = vmatprep.subr.bf16.mxu0 0
  %160 = vmatpush1.bf16.msra.mxu0 %v140
  %161 = vmatprep.subr.bf16.mxu0 0
  %162 = vmatpush1.bf16.msra.mxu0 %v141
  %163 = vmatprep.subr.bf16.mxu0 0
  %164 = vmatpush1.bf16.msra.mxu0 %v142
  %165 = vmatprep.subr.bf16.mxu0 0
  %166 = vmatpush1.bf16.msra.mxu0 %v143
  %167 = vmatprep.subr.bf16.mxu0 0
  %168 = vmatpush1.bf16.msra.mxu0 %v144
  %169 = vmatprep.subr.bf16.mxu0 0
  %170 = vmatpush1.bf16.msra.mxu0 0
  %171 = vmatprep.subr.bf16.mxu0 0
  %172 = vmatpush1.bf16.msra.mxu0 0
  %173 = vmatprep.subr.bf16.mxu0 0
  %174 = vmatpush1.bf16.msra.mxu0 0
  %175 = vmatprep.subr.bf16.mxu0 0
  %176 = vmatpush1.bf16.msra.mxu0 0
  %177 = vmatprep.subr.bf16.mxu0 0
  %178 = vmatpush1.bf16.msra.mxu0 0
  %179 = vmatprep.subr.bf16.mxu0 0
  %180 = vmatpush1.bf16.msra.mxu0 0
  %181 = vmatprep.subr.bf16.mxu0 0
  %182 = vmatpush1.bf16.msra.mxu0 0
  %183 = vmatprep.subr.bf16.mxu0 0
  %184 = vmatpush1.bf16.msra.mxu0 0
  %185 = vmatprep.mubr.bf16.mxu0 0
  %186 = vmatmul.mubr.bf16.gmra.mrb[0].mxu0 %v89
  %v187 = vpop.f32.mrb[0].mxu0
  %v188 = vadd.f32 %v55, %v187
  %v189 = vpop.f32.mrb[0].mxu0
  %v190 = vpop.f32.mrb[0].mxu0
  %v191 = vadd.f32 %v55, %v190
  %v192 = vpop.f32.mrb[0].mxu0
  %193 = vmatprep.mubr.bf16.mxu0 0
  %194 = vmatmul.mubr.bf16.gmra.mrb[0].mxu0 %v90
  %v195 = vpop.f32.mrb[0].mxu0
  %v196 = vadd.f32 %v55, %v195
  %v197 = vpop.f32.mrb[0].mxu0
  %v198 = vpop.f32.mrb[0].mxu0
  %v199 = vadd.f32 %v55, %v198
  %v200 = vpop.f32.mrb[0].mxu0
  %201 = vmatprep.mubr.bf16.mxu0 0
  %202 = vmatmul.mubr.bf16.gmra.mrb[0].mxu0 %v91
  %v203 = vpop.f32.mrb[0].mxu0
  %v204 = vadd.f32 %v55, %v203
  %v205 = vpop.f32.mrb[0].mxu0
  %v206 = vpop.f32.mrb[0].mxu0
  %v207 = vadd.f32 %v55, %v206
  %v208 = vpop.f32.mrb[0].mxu0
  %209 = vmatprep.mubr.bf16.mxu0 0
  %210 = vmatmul.mubr.bf16.gmra.mrb[0].mxu0 %v92
  %v211 = vpop.f32.mrb[0].mxu0
  %v212 = vadd.f32 %v55, %v211
  %v213 = vpop.f32.mrb[0].mxu0
  %v214 = vpop.f32.mrb[0].mxu0
  %v215 = vadd.f32 %v55, %v214
  %v216 = vpop.f32.mrb[0].mxu0
  %217 = vmatprep.mubr.bf16.mxu0 0
  %218 = vmatmul.mubr.bf16.gmra.mrb[0].mxu0 %v93
  %v219 = vpop.f32.mrb[0].mxu0
  %v220 = vadd.f32 %v55, %v219
  %v221 = vpop.f32.mrb[0].mxu0
  %v222 = vpop.f32.mrb[0].mxu0
  %v223 = vadd.f32 %v55, %v222
  %v224 = vpop.f32.mrb[0].mxu0
  %225 = vmatprep.mubr.bf16.mxu0 0
  %226 = vmatmul.mubr.bf16.gmra.mrb[0].mxu0 %v94
  %v227 = vpop.f32.mrb[0].mxu0
  %v228 = vadd.f32 %v55, %v227
  %v229 = vpop.f32.mrb[0].mxu0
  %v230 = vpop.f32.mrb[0].mxu0
  %v231 = vadd.f32 %v55, %v230
  %v232 = vpop.f32.mrb[0].mxu0
  %233 = vmatprep.mubr.bf16.mxu0 0
  %234 = vmatmul.mubr.bf16.gmra.mrb[0].mxu0 %v95
  %v235 = vpop.f32.mrb[0].mxu0
  %v236 = vadd.f32 %v55, %v235
  %v237 = vpop.f32.mrb[0].mxu0
  %v238 = vpop.f32.mrb[0].mxu0
  %v239 = vadd.f32 %v55, %v238
  %v240 = vpop.f32.mrb[0].mxu0
  %241 = vmatprep.mubr.bf16.mxu0 0
  %242 = vmatmul.mubr.bf16.gmra.mrb[0].mxu0 %v96
  %v243 = vpop.f32.mrb[0].mxu0
  %v244 = vadd.f32 %v55, %v243
  %v245 = vpop.f32.mrb[0].mxu0
  %v246 = vpop.f32.mrb[0].mxu0
  %v247 = vadd.f32 %v55, %v246
  %v248 = vpop.f32.mrb[0].mxu0
  %249 = vdwg.mxu0
  %v250 = vpack.c.bf16 %v191, %v188
  %v251 = vpack.c.bf16 %v199, %v196
  %v252 = vpack.c.bf16 %v207, %v204
  %v253 = vpack.c.bf16 %v215, %v212
  %v254 = vpack.c.bf16 %v223, %v220
  %v255 = vpack.c.bf16 %v231, %v228
  %v256 = vpack.c.bf16 %v239, %v236
  %v257 = vpack.c.bf16 %v247, %v244
  %v258 = vld [vmem:[%s3] sm:$0xf]
  %v259 = vld [vmem:[%s3 + $0x4] sm:$0xf]
  %v260 = vld [vmem:[%s3 + $0x8] sm:$0xf]
  %v261 = vld [vmem:[%s3 + $0xc] sm:$0xf]
  %v262 = vld [vmem:[%s3 + $0x10] sm:$0xf]
  %v263 = vld [vmem:[%s3 + $0x14] sm:$0xf]
  %v264 = vld [vmem:[%s3 + $0x18] sm:$0xf]
  %v265 = vld [vmem:[%s3 + $0x1c] sm:$0xf]
  %v266 = vld [vmem:[%s3 + $0x20] sm:$0xf]
  %v267 = vld [vmem:[%s3 + $0x24] sm:$0xf]
  %v268 = vld [vmem:[%s3 + $0x28] sm:$0xf]
  %v269 = vld [vmem:[%s3 + $0x2c] sm:$0xf]
  %v270 = vld [vmem:[%s3 + $0x30] sm:$0xf]
  %v271 = vld [vmem:[%s3 + $0x34] sm:$0xf]
  %v272 = vld [vmem:[%s3 + $0x38] sm:$0xf]
  %v273 = vld [vmem:[%s3 + $0x3c] sm:$0xf]
  %v290 = vunpack.c.l.b16 %v258
  %v291 = vunpack.c.l.b16 %v259
  %v292 = vunpack.c.l.b16 %v260
  %v293 = vunpack.c.l.b16 %v261
  %v294 = vunpack.c.l.b16 %v262
  %v295 = vunpack.c.l.b16 %v263
  %v296 = vunpack.c.l.b16 %v264
  %v297 = vunpack.c.l.b16 %v265
  %v298 = vunpack.c.l.b16 %v266
  %v299 = vunpack.c.l.b16 %v267
  %v300 = vunpack.c.l.b16 %v268
  %v301 = vunpack.c.l.b16 %v269
  %v302 = vunpack.c.l.b16 %v270
  %v303 = vunpack.c.l.b16 %v271
  %v304 = vunpack.c.l.b16 %v272
  %v305 = vunpack.c.l.b16 %v273
  %v306 = vpack.c.b16 %v291, %v290
  %v307 = vpack.c.b16 %v293, %v292
  %v308 = vpack.c.b16 %v295, %v294
  %v309 = vpack.c.b16 %v297, %v296
  %v310 = vpack.c.b16 %v299, %v298
  %v311 = vpack.c.b16 %v301, %v300
  %v312 = vpack.c.b16 %v303, %v302
  %v313 = vpack.c.b16 %v305, %v304
  %322 = vmatprep.subr.bf16.mxu0 0
  %323 = vmatpush1.bf16.msra.mxu0 %v306
  %324 = vmatprep.subr.bf16.mxu0 0
  %325 = vmatpush1.bf16.msra.mxu0 %v307
  %326 = vmatprep.subr.bf16.mxu0 0
  %327 = vmatpush1.bf16.msra.mxu0 %v308
  %328 = vmatprep.subr.bf16.mxu0 0
  %329 = vmatpush1.bf16.msra.mxu0 %v309
  %330 = vmatprep.subr.bf16.mxu0 0
  %331 = vmatpush1.bf16.msra.mxu0 %v310
  %332 = vmatprep.subr.bf16.mxu0 0
  %333 = vmatpush1.bf16.msra.mxu0 %v311
  %334 = vmatprep.subr.bf16.mxu0 0
  %335 = vmatpush1.bf16.msra.mxu0 %v312
  %336 = vmatprep.subr.bf16.mxu0 0
  %337 = vmatpush1.bf16.msra.mxu0 %v313
  %338 = vmatprep.subr.bf16.mxu0 0
  %339 = vmatpush1.bf16.msra.mxu0 0
  %340 = vmatprep.subr.bf16.mxu0 0
  %341 = vmatpush1.bf16.msra.mxu0 0
  %342 = vmatprep.subr.bf16.mxu0 0
  %343 = vmatpush1.bf16.msra.mxu0 0
  %344 = vmatprep.subr.bf16.mxu0 0
  %345 = vmatpush1.bf16.msra.mxu0 0
  %346 = vmatprep.subr.bf16.mxu0 0
  %347 = vmatpush1.bf16.msra.mxu0 0
  %348 = vmatprep.subr.bf16.mxu0 0
  %349 = vmatpush1.bf16.msra.mxu0 0
  %350 = vmatprep.subr.bf16.mxu0 0
  %351 = vmatpush1.bf16.msra.mxu0 0
  %352 = vmatprep.subr.bf16.mxu0 0
  %353 = vmatpush1.bf16.msra.mxu0 0
  %354 = vmatprep.mubr.bf16.mxu0 0
  %355 = vmatmul.mubr.bf16.gmra.mrb[0].mxu0 %v250
  %v356 = vpop.f32.mrb[0].mxu0
  %v357 = vadd.f32 0.0, %v356
  %v358 = vpop.f32.mrb[0].mxu0
  %v359 = vpop.f32.mrb[0].mxu0
  %v360 = vadd.f32 0.0, %v359
  %v361 = vpop.f32.mrb[0].mxu0
  %362 = vmatprep.mubr.bf16.mxu0 0
  %363 = vmatmul.mubr.bf16.gmra.mrb[0].mxu0 %v251
  %v364 = vpop.f32.mrb[0].mxu0
  %v365 = vadd.f32 0.0, %v364
  %v366 = vpop.f32.mrb[0].mxu0
  %v367 = vpop.f32.mrb[0].mxu0
  %v368 = vadd.f32 0.0, %v367
  %v369 = vpop.f32.mrb[0].mxu0
  %370 = vmatprep.mubr.bf16.mxu0 0
  %371 = vmatmul.mubr.bf16.gmra.mrb[0].mxu0 %v252
  %v372 = vpop.f32.mrb[0].mxu0
  %v373 = vadd.f32 0.0, %v372
  %v374 = vpop.f32.mrb[0].mxu0
  %v375 = vpop.f32.mrb[0].mxu0
  %v376 = vadd.f32 0.0, %v375
  %v377 = vpop.f32.mrb[0].mxu0
  %378 = vmatprep.mubr.bf16.mxu0 0
  %379 = vmatmul.mubr.bf16.gmra.mrb[0].mxu0 %v253
  %v380 = vpop.f32.mrb[0].mxu0
  %v381 = vadd.f32 0.0, %v380
  %v382 = vpop.f32.mrb[0].mxu0
  %v383 = vpop.f32.mrb[0].mxu0
  %v384 = vadd.f32 0.0, %v383
  %v385 = vpop.f32.mrb[0].mxu0
  %386 = vmatprep.mubr.bf16.mxu0 0
  %387 = vmatmul.mubr.bf16.gmra.mrb[0].mxu0 %v254
  %v388 = vpop.f32.mrb[0].mxu0
  %v389 = vadd.f32 0.0, %v388
  %v390 = vpop.f32.mrb[0].mxu0
  %v391 = vpop.f32.mrb[0].mxu0
  %v392 = vadd.f32 0.0, %v391
  %v393 = vpop.f32.mrb[0].mxu0
  %394 = vmatprep.mubr.bf16.mxu0 0
  %395 = vmatmul.mubr.bf16.gmra.mrb[0].mxu0 %v255
  %v396 = vpop.f32.mrb[0].mxu0
  %v397 = vadd.f32 0.0, %v396
  %v398 = vpop.f32.mrb[0].mxu0
  %v399 = vpop.f32.mrb[0].mxu0
  %v400 = vadd.f32 0.0, %v399
  %v401 = vpop.f32.mrb[0].mxu0
  %402 = vmatprep.mubr.bf16.mxu0 0
  %403 = vmatmul.mubr.bf16.gmra.mrb[0].mxu0 %v256
  %v404 = vpop.f32.mrb[0].mxu0
  %v405 = vadd.f32 0.0, %v404
  %v406 = vpop.f32.mrb[0].mxu0
  %v407 = vpop.f32.mrb[0].mxu0
  %v408 = vadd.f32 0.0, %v407
  %v409 = vpop.f32.mrb[0].mxu0
  %410 = vmatprep.mubr.bf16.mxu0 0
  %411 = vmatmul.mubr.bf16.gmra.mrb[0].mxu0 %v257
  %v412 = vpop.f32.mrb[0].mxu0
  %v413 = vadd.f32 0.0, %v412
  %v414 = vpop.f32.mrb[0].mxu0
  %v415 = vpop.f32.mrb[0].mxu0
  %v416 = vadd.f32 0.0, %v415
  %v417 = vpop.f32.mrb[0].mxu0
  %418 = vdwg.mxu0
  %v419 = vlaneseq
  %v420 = vand.u32 %v419, 127
  %vm421 = vcmp.lt.s32.totalorder %v420, 1
  %v422 = vsel %vm421, %v357, -1e+30
  %v423 = vsel %vm421, %v360, -1e+30
  %v424 = vsel %vm421, %v365, -1e+30
  %v425 = vsel %vm421, %v368, -1e+30
  %v426 = vsel %vm421, %v373, -1e+30
  %v427 = vsel %vm421, %v376, -1e+30
  %v428 = vsel %vm421, %v381, -1e+30
  %v429 = vsel %vm421, %v384, -1e+30
  %v430 = vsel %vm421, %v389, -1e+30
  %v431 = vsel %vm421, %v392, -1e+30
  %v432 = vsel %vm421, %v397, -1e+30
  %v433 = vsel %vm421, %v400, -1e+30
  %v434 = vsel %vm421, %v405, -1e+30
  %v435 = vsel %vm421, %v408, -1e+30
  %v436 = vsel %vm421, %v413, -1e+30
  %v437 = vsel %vm421, %v416, -1e+30
  %438 = vmax.xlane.f32.xlu0 %v422
  %v439 = vpop.xlane.xlu0 %438
  %440 = vmax.xlane.f32.xlu0 %v423
  %v441 = vpop.xlane.xlu0 %440
  %442 = vmax.xlane.f32.xlu0 %v424
  %v443 = vpop.xlane.xlu0 %442
  %444 = vmax.xlane.f32.xlu0 %v425
  %v445 = vpop.xlane.xlu0 %444
  %446 = vmax.xlane.f32.xlu0 %v426
  %v447 = vpop.xlane.xlu0 %446
  %448 = vmax.xlane.f32.xlu0 %v427
  %v449 = vpop.xlane.xlu0 %448
  %450 = vmax.xlane.f32.xlu0 %v428
  %v451 = vpop.xlane.xlu0 %450
  %452 = vmax.xlane.f32.xlu0 %v429
  %v453 = vpop.xlane.xlu0 %452
  %454 = vmax.xlane.f32.xlu0 %v430
  %v455 = vpop.xlane.xlu0 %454
  %456 = vmax.xlane.f32.xlu0 %v431
  %v457 = vpop.xlane.xlu0 %456
  %458 = vmax.xlane.f32.xlu0 %v432
  %v459 = vpop.xlane.xlu0 %458
  %460 = vmax.xlane.f32.xlu0 %v433
  %v461 = vpop.xlane.xlu0 %460
  %462 = vmax.xlane.f32.xlu0 %v434
  %v463 = vpop.xlane.xlu0 %462
  %464 = vmax.xlane.f32.xlu0 %v435
  %v465 = vpop.xlane.xlu0 %464
  %466 = vmax.xlane.f32.xlu0 %v436
  %v467 = vpop.xlane.xlu0 %466
  %468 = vmax.xlane.f32.xlu0 %v437
  %v469 = vpop.xlane.xlu0 %468
  %v470 = vsub.f32 %v422, %v439
  %v471 = vsub.f32 %v423, %v441
  %v472 = vsub.f32 %v424, %v443
  %v473 = vsub.f32 %v425, %v445
  %v474 = vsub.f32 %v426, %v447
  %v475 = vsub.f32 %v427, %v449
  %v476 = vsub.f32 %v428, %v451
  %v477 = vsub.f32 %v429, %v453
  %v478 = vsub.f32 %v430, %v455
  %v479 = vsub.f32 %v431, %v457
  %v480 = vsub.f32 %v432, %v459
  %v481 = vsub.f32 %v433, %v461
  %v482 = vsub.f32 %v434, %v463
  %v483 = vsub.f32 %v435, %v465
  %v484 = vsub.f32 %v436, %v467
  %v485 = vsub.f32 %v437, %v469
  %v486 = vmul.f32 %v470, 1.442695
  %v487 = vpow.pop %v486
  %v488 = vmul.f32 %v471, 1.442695
  %v489 = vpow.pop %v488
  %v490 = vmul.f32 %v472, 1.442695
  %v491 = vpow.pop %v490
  %v492 = vmul.f32 %v473, 1.442695
  %v493 = vpow.pop %v492
  %v494 = vmul.f32 %v474, 1.442695
  %v495 = vpow.pop %v494
  %v496 = vmul.f32 %v475, 1.442695
  %v497 = vpow.pop %v496
  %v498 = vmul.f32 %v476, 1.442695
  %v499 = vpow.pop %v498
  %v500 = vmul.f32 %v477, 1.442695
  %v501 = vpow.pop %v500
  %v502 = vmul.f32 %v478, 1.442695
  %v503 = vpow.pop %v502
  %v504 = vmul.f32 %v479, 1.442695
  %v505 = vpow.pop %v504
  %v506 = vmul.f32 %v480, 1.442695
  %v507 = vpow.pop %v506
  %v508 = vmul.f32 %v481, 1.442695
  %v509 = vpow.pop %v508
  %v510 = vmul.f32 %v482, 1.442695
  %v511 = vpow.pop %v510
  %v512 = vmul.f32 %v483, 1.442695
  %v513 = vpow.pop %v512
  %v514 = vmul.f32 %v484, 1.442695
  %v515 = vpow.pop %v514
  %v516 = vmul.f32 %v485, 1.442695
  %v517 = vpow.pop %v516
  %518 = vadd.xlane.f32.xlu0 %v487
  %v519 = vpop.xlane.xlu0 %518
  %520 = vadd.xlane.f32.xlu0 %v489
  %v521 = vpop.xlane.xlu0 %520
  %522 = vadd.xlane.f32.xlu0 %v491
  %v523 = vpop.xlane.xlu0 %522
  %524 = vadd.xlane.f32.xlu0 %v493
  %v525 = vpop.xlane.xlu0 %524
  %526 = vadd.xlane.f32.xlu0 %v495
  %v527 = vpop.xlane.xlu0 %526
  %528 = vadd.xlane.f32.xlu0 %v497
  %v529 = vpop.xlane.xlu0 %528
  %530 = vadd.xlane.f32.xlu0 %v499
  %v531 = vpop.xlane.xlu0 %530
  %532 = vadd.xlane.f32.xlu0 %v501
  %v533 = vpop.xlane.xlu0 %532
  %534 = vadd.xlane.f32.xlu0 %v503
  %v535 = vpop.xlane.xlu0 %534
  %536 = vadd.xlane.f32.xlu0 %v505
  %v537 = vpop.xlane.xlu0 %536
  %538 = vadd.xlane.f32.xlu0 %v507
  %v539 = vpop.xlane.xlu0 %538
  %540 = vadd.xlane.f32.xlu0 %v509
  %v541 = vpop.xlane.xlu0 %540
  %542 = vadd.xlane.f32.xlu0 %v511
  %v543 = vpop.xlane.xlu0 %542
  %544 = vadd.xlane.f32.xlu0 %v513
  %v545 = vpop.xlane.xlu0 %544
  %546 = vadd.xlane.f32.xlu0 %v515
  %v547 = vpop.xlane.xlu0 %546
  %548 = vadd.xlane.f32.xlu0 %v517
  %v549 = vpop.xlane.xlu0 %548
  %v550 = vrcp.pop %v519
  %v551 = vmul.f32 %v487, %v550
  %v552 = vrcp.pop %v521
  %v553 = vmul.f32 %v489, %v552
  %v554 = vrcp.pop %v523
  %v555 = vmul.f32 %v491, %v554
  %v556 = vrcp.pop %v525
  %v557 = vmul.f32 %v493, %v556
  %v558 = vrcp.pop %v527
  %v559 = vmul.f32 %v495, %v558
  %v560 = vrcp.pop %v529
  %v561 = vmul.f32 %v497, %v560
  %v562 = vrcp.pop %v531
  %v563 = vmul.f32 %v499, %v562
  %v564 = vrcp.pop %v533
  %v565 = vmul.f32 %v501, %v564
  %v566 = vrcp.pop %v535
  %v567 = vmul.f32 %v503, %v566
  %v568 = vrcp.pop %v537
  %v569 = vmul.f32 %v505, %v568
  %v570 = vrcp.pop %v539
  %v571 = vmul.f32 %v507, %v570
  %v572 = vrcp.pop %v541
  %v573 = vmul.f32 %v509, %v572
  %v574 = vrcp.pop %v543
  %v575 = vmul.f32 %v511, %v574
  %v576 = vrcp.pop %v545
  %v577 = vmul.f32 %v513, %v576
  %v578 = vrcp.pop %v547
  %v579 = vmul.f32 %v515, %v578
  %v580 = vrcp.pop %v549
  %v581 = vmul.f32 %v517, %v580
  %582 = vst [vmem:[%s4] sm:$0xff] %v551
  %583 = vst [vmem:[%s4 + $0x8] sm:$0xff] %v553
  %584 = vst [vmem:[%s4 + $0x10] sm:$0xff] %v555
  %585 = vst [vmem:[%s4 + $0x18] sm:$0xff] %v557
  %586 = vst [vmem:[%s4 + $0x20] sm:$0xff] %v559
  %587 = vst [vmem:[%s4 + $0x28] sm:$0xff] %v561
  %588 = vst [vmem:[%s4 + $0x30] sm:$0xff] %v563
  %589 = vst [vmem:[%s4 + $0x38] sm:$0xff] %v565
  %590 = vst [vmem:[%s4 + $0x40] sm:$0xff] %v567
  %591 = vst [vmem:[%s4 + $0x48] sm:$0xff] %v569
  %592 = vst [vmem:[%s4 + $0x50] sm:$0xff] %v571
  %593 = vst [vmem:[%s4 + $0x58] sm:$0xff] %v573
  %594 = vst [vmem:[%s4 + $0x60] sm:$0xff] %v575
  %595 = vst [vmem:[%s4 + $0x68] sm:$0xff] %v577
  %596 = vst [vmem:[%s4 + $0x70] sm:$0xff] %v579
  %597 = vst [vmem:[%s4 + $0x78] sm:$0xff] %v581
  // Predicated region
  $region18: #{simple_vit_attention_prepared.3} parent=0 // pred_check
    _
  $region19: #{simple_vit_attention_prepared.3} parent=0 // pred_check_branch
    %599 = sbr.rel (0) target = $region21
  $region20: #{simple_vit_attention_prepared.3} parent=0 // pred_region
    _
  $region21: #{simple_vit_attention_prepared.3} parent=0 // pred_fallthru
    _
  // Predicated region
  $region22: #{simple_vit_attention_prepared.3} parent=0 // pred_check
    _
  $region23: #{simple_vit_attention_prepared.3} parent=0 // pred_check_branch
    %601 = sbr.rel (0) target = $region25
  $region24: #{simple_vit_attention_prepared.3} parent=0 // pred_region
    _
  $region25: #{simple_vit_attention_prepared.3} parent=0 // pred_fallthru
    _

</llo_original>
